<compile_context>
chip_gen: v7x
topology: tpu7x:2x2x1
jax: 0.10.0
libtpu: 0.0.40
codegen_flags: <defaults>
</compile_context>

<pallas_src>
import jax
import jax.numpy as jnp
from jax.experimental import pallas as pl
from jax.experimental.pallas import tpu as pltpu

IN_DIM = 28 * 28   # 784
HID_DIM = 128
OUT_DIM = 10
OUT_PAD = 128      # lane-dense padded fc2 output width
DEFAULT_TILE_B = 2048


def _round_up(n, m):
    return ((n + m - 1) // m) * m


def _mlp_kernel(x_ref, w1_ref, b1_ref, w2_ref, b2_ref, o_ref):
    # Cast the f32 x tile to bf16 on the VPU (hidden under the x DMA) right
    # before the MXU dot; avoids a separate wrapper-side HBM pass over x.
    xb = x_ref[...].astype(jnp.bfloat16)
    # fc1: (tile_b, 784) bf16 @ (784, 128) bf16 -> f32 accumulation on the MXU.
    h = jnp.dot(xb, w1_ref[...], preferred_element_type=jnp.float32)
    # bias + ReLU in f32 on the VPU.
    h = jnp.maximum(h + b1_ref[...], 0.0)
    # fc2: (tile_b, 128) bf16 @ (128, 128) bf16 -> f32; output padded to 128
    # lanes so the store is an unmasked, lane-dense vst.  Stored as bf16.
    y = jnp.dot(h.astype(jnp.bfloat16), w2_ref[...],
                preferred_element_type=jnp.float32)
    o_ref[...] = (y + b2_ref[...]).astype(o_ref.dtype)
    # TODO(synk): the PyTorch forward prints full intermediate activations;
    # there is no clean host-side full-tensor printing from inside a Pallas
    # kernel, so the prints are omitted.


def prepare_params(w1, b1, w2, b2):
    """One-time prep (hoisted out of the per-call path): bf16 weight casts and
    lane-dense zero-padding of fc2 to 128 output lanes."""
    w1_bf16 = w1.astype(jnp.bfloat16)
    b1_f32 = b1.reshape(1, HID_DIM).astype(jnp.float32)
    w2_p = jnp.zeros((HID_DIM, OUT_PAD), jnp.bfloat16).at[:, :OUT_DIM].set(
        w2.astype(jnp.bfloat16))
    b2_p = jnp.zeros((1, OUT_PAD), jnp.float32).at[:, :OUT_DIM].set(
        b2.reshape(1, OUT_DIM).astype(jnp.float32))
    return w1_bf16, b1_f32, w2_p, b2_p


def _select_tile(batch, requested):
    """Large tiles (amortize ~0.35 us/step overhead) but keep >= 2 grid steps
    when the batch allows, so both v7x TensorCores get work."""
    b8 = _round_up(batch, 8)
    if b8 <= 16:
        return b8
    two_step = _round_up((b8 + 1) // 2, 8)
    return max(8, min(requested, two_step))


def simple_net_forward(x, params, *, tile_b=DEFAULT_TILE_B):
    """SimpleNet forward. x flattens to (B, 784); returns (B, 10) float32.

    params = prepare_params(w1, b1, w2, b2) with weights stored (in, out).
    """
    w1_bf16, b1_f32, w2_p, b2_p = params
    x2d = x.reshape(-1, IN_DIM).astype(jnp.float32)
    B = x2d.shape[0]

    tile = _select_tile(B, tile_b)
    num_tiles = (B + tile - 1) // tile   # boundary block padded/masked by Pallas

    bytes_accessed = (
        B * IN_DIM * 4                # x stream (f32, single read)
        + IN_DIM * HID_DIM * 2        # w1 (bf16)
        + HID_DIM * OUT_PAD * 2       # w2 (bf16, padded)
        + (HID_DIM + OUT_PAD) * 4     # biases (f32)
        + B * OUT_PAD * 2             # padded output (bf16)
    )
    cost = pl.CostEstimate(
        flops=2 * B * (IN_DIM * HID_DIM + HID_DIM * OUT_PAD),
        transcendentals=0,
        bytes_accessed=bytes_accessed,
    )

    out_padded = pl.pallas_call(
        _mlp_kernel,
        out_shape=jax.ShapeDtypeStruct((B, OUT_PAD), jnp.bfloat16),
        grid=(num_tiles,),
        in_specs=[
            # x: streamed f32 per batch tile (double-buffered by the pipeline).
            pl.BlockSpec((tile, IN_DIM), lambda i: (i, 0)),
            # weights / biases: constant index_map -> stay VMEM-resident.
            pl.BlockSpec((IN_DIM, HID_DIM), lambda i: (0, 0)),
            pl.BlockSpec((1, HID_DIM), lambda i: (0, 0)),
            pl.BlockSpec((HID_DIM, OUT_PAD), lambda i: (0, 0)),
            pl.BlockSpec((1, OUT_PAD), lambda i: (0, 0)),
        ],
        out_specs=pl.BlockSpec((tile, OUT_PAD), lambda i: (i, 0)),
        compiler_params=pltpu.CompilerParams(
            # Batch tiles are independent -> shard across v7x's 2 TensorCores.
            dimension_semantics=("parallel",),
            # tile_b=2048 needs ~15 MiB with double buffering; raise above
            # v5e's 16 MiB scoped default, still well under physical VMEM.
            vmem_limit_bytes=32 << 20,
        ),
        cost_estimate=cost,
    )(x2d, w1_bf16, b1_f32, w2_p, b2_p)

    return out_padded[:B, :OUT_DIM].astype(jnp.float32)


def init_params(key):
    """Deterministic init matching nn.Linear shapes (stored transposed)."""
    k1, k2, k3, k4 = jax.random.split(key, 4)
    # PyTorch nn.Linear uses U(-1/sqrt(fan_in), 1/sqrt(fan_in)); mirror that.
    bound1 = 1.0 / jnp.sqrt(jnp.float32(IN_DIM))
    bound2 = 1.0 / jnp.sqrt(jnp.float32(HID_DIM))
    w1 = jax.random.uniform(k1, (IN_DIM, HID_DIM), jnp.float32, -bound1, bound1)
    b1 = jax.random.uniform(k2, (1, HID_DIM), jnp.float32, -bound1, bound1)
    w2 = jax.random.uniform(k3, (HID_DIM, OUT_DIM), jnp.float32, -bound2, bound2)
    b2 = jax.random.uniform(k4, (1, OUT_DIM), jnp.float32, -bound2, bound2)
    return w1, b1, w2, b2


def _reference(x, w1, b1, w2, b2):
    """Pure-JAX reference with the same bf16 operand rounding + f32 accum."""
    x2d = x.reshape(-1, IN_DIM).astype(jnp.float32)
    xb = x2d.astype(jnp.bfloat16)
    w1b = w1.astype(jnp.bfloat16)
    w2b = w2.astype(jnp.bfloat16)
    h = jnp.maximum(
        jnp.dot(xb, w1b, preferred_element_type=jnp.float32) + b1, 0.0)
    y = jnp.dot(h.astype(jnp.bfloat16), w2b,
                preferred_element_type=jnp.float32) + b2
    return y


if __name__ == "__main__":
    key = jax.random.PRNGKey(0)
    kx, kx2, kp = jax.random.split(key, 3)
    w1, b1, w2, b2 = init_params(kp)
    params = prepare_params(w1, b1, w2, b2)   # one-time weight prep

    # Small batch of MNIST-like inputs, NCHW: (2, 1, 28, 28) -> single tile.
    x = jax.random.normal(kx, (2, 1, 28, 28), jnp.float32)
    out = jax.block_until_ready(simple_net_forward(x, params))
    assert out.shape == (2, OUT_DIM)

    ref = _reference(x, w1, b1, w2, b2)
    # bf16-output storage -> compare at bf16-level tolerance.
    assert jnp.allclose(out, ref, atol=5e-2, rtol=5e-2)
    ref_f32 = jnp.maximum(x.reshape(-1, IN_DIM) @ w1 + b1, 0.0) @ w2 + b2
    assert jnp.allclose(out, ref_f32, atol=1e-1, rtol=5e-2)

    # Second check: non-tile-aligned batch exercising a multi-step grid with a
    # masked boundary block (no explicit jnp.pad anywhere).
    x2 = jax.random.normal(kx2, (100, 1, 28, 28), jnp.float32)
    out2 = jax.block_until_ready(simple_net_forward(x2, params))
    assert out2.shape == (100, OUT_DIM)
    ref2 = _reference(x2, w1, b1, w2, b2)
    assert jnp.allclose(out2, ref2, atol=5e-2, rtol=5e-2)

    print("KERNEL_OK")
</pallas_src>

<mosaic_0001>
module attributes {stable_mosaic.version = 11 : i64} {
  func.func @_mlp_kernel(%arg0: i32, %arg1: memref<8x784xf32, #tpu.memory_space<vmem>>, %arg2: memref<784x128xbf16, #tpu.memory_space<vmem>>, %arg3: memref<1x128xf32, #tpu.memory_space<vmem>>, %arg4: memref<128x128xbf16, #tpu.memory_space<vmem>>, %arg5: memref<1x128xf32, #tpu.memory_space<vmem>>, %arg6: memref<8x128xbf16, #tpu.memory_space<vmem>>) attributes {dimension_semantics = [#tpu.dimension_semantics<parallel>], iteration_bounds = array<i64: 1>, scalar_prefetch = 0 : i64, scratch_operands = 0 : i64, tpu.core_type = #tpu.core_type<tc>, window_params = [{transform_indices = @transform_0, window_bounds = array<i64: 8, 784>}, {pipeline_mode = #tpu.pipeline_mode<synchronous>, transform_indices = @transform_1, window_bounds = array<i64: 784, 128>}, {pipeline_mode = #tpu.pipeline_mode<synchronous>, transform_indices = @transform_2, window_bounds = array<i64: 1, 128>}, {pipeline_mode = #tpu.pipeline_mode<synchronous>, transform_indices = @transform_3, window_bounds = array<i64: 128, 128>}, {pipeline_mode = #tpu.pipeline_mode<synchronous>, transform_indices = @transform_4, window_bounds = array<i64: 1, 128>}, {transform_indices = @transform_5, window_bounds = array<i64: 8, 128>}]} {
    %c0 = arith.constant 0 : index
    %c0_0 = arith.constant 0 : index
    %0 = vector.load %arg1[%c0, %c0_0] : memref<8x784xf32, #tpu.memory_space<vmem>>, vector<8x784xf32>
    %1 = arith.truncf %0 : vector<8x784xf32> to vector<8x784xbf16>
    %c0_1 = arith.constant 0 : index
    %c0_2 = arith.constant 0 : index
    %2 = vector.load %arg2[%c0_1, %c0_2] : memref<784x128xbf16, #tpu.memory_space<vmem>>, vector<784x128xbf16>
    %cst = arith.constant dense<0.000000e+00> : vector<8x128xf32>
    %3 = tpu.matmul %1, %2, %cst {dimension_numbers = #tpu.dot_dimension_numbers<[1], [0], [0], [1], [0, 0, 1, 1], [], []>} : vector<8x784xbf16>, vector<784x128xbf16>, vector<8x128xf32> -> vector<8x128xf32>
    %c0_3 = arith.constant 0 : index
    %c0_4 = arith.constant 0 : index
    %4 = vector.load %arg3[%c0_3, %c0_4] : memref<1x128xf32, #tpu.memory_space<vmem>>, vector<1x128xf32>
    %5 = vector.broadcast %4 : vector<1x128xf32> to vector<8x128xf32>
    %6 = arith.addf %3, %5 : vector<8x128xf32>
    %cst_5 = arith.constant 0.000000e+00 : f32
    %7 = vector.broadcast %cst_5 : f32 to vector<8x128xf32>
    %8 = arith.maximumf %6, %7 : vector<8x128xf32>
    %9 = arith.truncf %8 : vector<8x128xf32> to vector<8x128xbf16>
    %c0_6 = arith.constant 0 : index
    %c0_7 = arith.constant 0 : index
    %10 = vector.load %arg4[%c0_6, %c0_7] : memref<128x128xbf16, #tpu.memory_space<vmem>>, vector<128x128xbf16>
    %cst_8 = arith.constant dense<0.000000e+00> : vector<8x128xf32>
    %11 = tpu.matmul %9, %10, %cst_8 {dimension_numbers = #tpu.dot_dimension_numbers<[1], [0], [0], [1], [0, 0, 1, 1], [], []>} : vector<8x128xbf16>, vector<128x128xbf16>, vector<8x128xf32> -> vector<8x128xf32>
    %c0_9 = arith.constant 0 : index
    %c0_10 = arith.constant 0 : index
    %12 = vector.load %arg5[%c0_9, %c0_10] : memref<1x128xf32, #tpu.memory_space<vmem>>, vector<1x128xf32>
    %13 = vector.broadcast %12 : vector<1x128xf32> to vector<8x128xf32>
    %14 = arith.addf %11, %13 : vector<8x128xf32>
    %15 = arith.truncf %14 : vector<8x128xf32> to vector<8x128xbf16>
    %c0_11 = arith.constant 0 : index
    %c0_12 = arith.constant 0 : index
    %16 = vector.load %arg6[%c0_11, %c0_12] : memref<8x128xbf16, #tpu.memory_space<vmem>>, vector<8x128xbf16>
    tpu.vector_store %arg6[%c0_11, %c0_12], %15 {strides = array<i32>} : memref<8x128xbf16, #tpu.memory_space<vmem>>, vector<8x128xbf16>,
    return
  }
  func.func @transform_0(%arg0: i32) -> (i32, i32) {
    %c0_i32 = arith.constant 0 : i32
    %c0_i32_0 = arith.constant 0 : i32
    return %arg0, %c0_i32 : i32, i32
  }
  func.func @transform_1(%arg0: i32) -> (i32, i32) {
    %c0_i32 = arith.constant 0 : i32
    %c0_i32_0 = arith.constant 0 : i32
    %c0_i32_1 = arith.constant 0 : i32
    return %c0_i32, %c0_i32_0 : i32, i32
  }
  func.func @transform_2(%arg0: i32) -> (i32, i32) {
    %c0_i32 = arith.constant 0 : i32
    %c0_i32_0 = arith.constant 0 : i32
    %c0_i32_1 = arith.constant 0 : i32
    return %c0_i32, %c0_i32_0 : i32, i32
  }
  func.func @transform_3(%arg0: i32) -> (i32, i32) {
    %c0_i32 = arith.constant 0 : i32
    %c0_i32_0 = arith.constant 0 : i32
    %c0_i32_1 = arith.constant 0 : i32
    return %c0_i32, %c0_i32_0 : i32, i32
  }
  func.func @transform_4(%arg0: i32) -> (i32, i32) {
    %c0_i32 = arith.constant 0 : i32
    %c0_i32_0 = arith.constant 0 : i32
    %c0_i32_1 = arith.constant 0 : i32
    return %c0_i32, %c0_i32_0 : i32, i32
  }
  func.func @transform_5(%arg0: i32) -> (i32, i32) {
    %c0_i32 = arith.constant 0 : i32
    %c0_i32_0 = arith.constant 0 : i32
    return %arg0, %c0_i32 : i32, i32
  }
}

</mosaic_0001>

<llo_original>
// kernel: tpu_custom_call.1
$region0: #{tpu_custom_call.1}
  #allocation0 [shape = 'u32[]', space=smem, size = 0x4, offset = 0x4, fixed_abs, tag = 'smem constant byte address 0x4 - core index']
  #allocation1 [shape = 'u32[144,128]{1,0:T(1,128)}', space=vmem, size = 0x12000, scoped, tag = 'internal scratch']
  %s0 = inlined_call_operand.hbm [shape: f32[2,784], index: 0, kind: input, shape index: {}]
  %s1 = inlined_call_operand.hbm [shape: bf16[784,128], index: 1, kind: input, shape index: {}]
  %s2 = inlined_call_operand.vmem [shape: f32[1,128], index: 2, kind: input, shape index: {}]
  %s3 = inlined_call_operand.hbm [shape: bf16[128,128], index: 3, kind: input, shape index: {}]
  %s4 = inlined_call_operand.vmem [shape: f32[1,128], index: 4, kind: input, shape index: {}]
  %s5 = inlined_call_operand.hbm [shape: bf16[2,128], index: 5, kind: output, shape index: {}]
  %s6 = sld [smem:[#allocation0]]
  $region42: #{tpu_custom_call.1} parent=0
    _
  %s8 = ssub.s32 1, %s6
  %s9 = scalar_select 0, %s8, %s6
  $region1: #{tpu_custom_call.1} parent=0
    #allocation2 [shape = 'u8[28672]{0}', space=vmem, size = 0x7000, scoped, tag = 'input window, operand 0, single buffered']
    #allocation3 [shape = 's32[1]{0}', space=sflag, size = 0x4, scoped, tag = 'scoped memory for tpu_custom_call.1']
    #allocation4 [shape = 's32[1]{0}', space=sflag, size = 0x4, scoped, tag = 'scoped memory for tpu_custom_call.1']
    #allocation5 [shape = 'u8[200704]{0}', space=vmem, size = 0x31000, scoped, tag = 'input window, operand 1, single buffered']
    #allocation6 [shape = 's32[1]{0}', space=sflag, size = 0x4, scoped, tag = 'scoped memory for tpu_custom_call.1']
    #allocation7 [shape = 'u8[32768]{0}', space=vmem, size = 0x8000, scoped, tag = 'input window, operand 3, single buffered']
    #allocation8 [shape = 'u8[2048]{0}', space=vmem, size = 0x800, scoped, tag = 'output window, operand 0, single buffered']
    %10 = vsyncpa [#allocation3], 0
    %11 = vsyncpa [#allocation6], 0
    %12 = vsyncpa [#allocation4], 0
    // Predicated region
    $region2: #{tpu_custom_call.1} parent=1 // pred_check
      _
    $region3: #{tpu_custom_call.1} parent=1 // pred_check_branch
      %14 = sbr.rel (0) target = $region5
    $region4: #{tpu_custom_call.1} parent=1 // pred_region
      %s16 = ssub.s32 896, 224
      %17 = vsyncadd [#allocation3], %s16
      %s18 = sshll.u32 [#allocation2], 4
      %s19 = int_to_ptr.vmem [resolvable:$true] %s18
      %24 = dma.hbm_to_vmem [thread:$0]  %s0, 224, %s19, [#allocation3], 224, 224, 14
    $region5: #{tpu_custom_call.1} parent=1 // pred_fallthru
      _
    // Predicated region
    $region6: #{tpu_custom_call.1} parent=1 // pred_check
      _
    $region7: #{tpu_custom_call.1} parent=1 // pred_check_branch
      %26 = sbr.rel (0) target = $region9
    $region8: #{tpu_custom_call.1} parent=1 // pred_region
      %s28 = ssub.s32 6272, 6272
      %29 = vsyncadd [#allocation6], %s28
      %s30 = sshll.u32 [#allocation5], 4
      %s31 = int_to_ptr.vmem [resolvable:$true] %s30
      %36 = dma.hbm_to_vmem [thread:$0]  %s1, 6272, %s31, [#allocation6], 64, 64, 4
    $region9: #{tpu_custom_call.1} parent=1 // pred_fallthru
      _
    // Predicated region
    $region10: #{tpu_custom_call.1} parent=1 // pred_check
      _
    $region11: #{tpu_custom_call.1} parent=1 // pred_check_branch
      %38 = sbr.rel (0) target = $region13
    $region12: #{tpu_custom_call.1} parent=1 // pred_region
      _
    $region13: #{tpu_custom_call.1} parent=1 // pred_fallthru
      _
    // Predicated region
    $region14: #{tpu_custom_call.1} parent=1 // pred_check
      _
    $region15: #{tpu_custom_call.1} parent=1 // pred_check_branch
      %40 = sbr.rel (0) target = $region17
    $region16: #{tpu_custom_call.1} parent=1 // pred_region
      %s42 = ssub.s32 1024, 1024
      %43 = vsyncadd [#allocation6], %s42
      %s44 = sshll.u32 [#allocation7], 4
      %s45 = int_to_ptr.vmem [resolvable:$true] %s44
      %50 = dma.hbm_to_vmem [thread:$0]  %s3, 1024, %s45, [#allocation6], 64, 64, 4
    $region17: #{tpu_custom_call.1} parent=1 // pred_fallthru
      _
    // Predicated region
    $region18: #{tpu_custom_call.1} parent=1 // pred_check
      _
    $region19: #{tpu_custom_call.1} parent=1 // pred_check_branch
      %52 = sbr.rel (0) target = $region21
    $region20: #{tpu_custom_call.1} parent=1 // pred_region
      _
    $region21: #{tpu_custom_call.1} parent=1 // pred_fallthru
      _
    // Predicated region
    $region22: #{tpu_custom_call.1} parent=1 // pred_check
      _
    $region23: #{tpu_custom_call.1} parent=1 // pred_check_branch
      %54 = sbr.rel (0) target = $region25
    $region24: #{tpu_custom_call.1} parent=1 // pred_region
      %55 = dma.done [#allocation3], 896
    $region25: #{tpu_custom_call.1} parent=1 // pred_fallthru
      _
    // Predicated region
    $region26: #{tpu_custom_call.1} parent=1 // pred_check
      _
    $region27: #{tpu_custom_call.1} parent=1 // pred_check_branch
      %57 = sbr.rel (0) target = $region29
    $region28: #{tpu_custom_call.1} parent=1 // pred_region
      %58 = dma.done [#allocation6], 6272
    $region29: #{tpu_custom_call.1} parent=1 // pred_fallthru
      _
    // Predicated region
    $region30: #{tpu_custom_call.1} parent=1 // pred_check
      _
    $region31: #{tpu_custom_call.1} parent=1 // pred_check_branch
      %60 = sbr.rel (0) target = $region33
    $region32: #{tpu_custom_call.1} parent=1 // pred_region
      %61 = dma.done [#allocation6], 1024
    $region33: #{tpu_custom_call.1} parent=1 // pred_fallthru
      _
    %v63 = vld [vmem:[#allocation2] sm:$0xff]
    %v64 = vld [vmem:[#allocation2 + $0x8] sm:$0x3f]
    %v65 = vld [vmem:[#allocation2 + $0xe] sm:$0xff]
    %v66 = vld [vmem:[#allocation2 + $0x16] sm:$0x3f]
    %v67 = vld [vmem:[#allocation2 + $0x1c] sm:$0xff]
    %v68 = vld [vmem:[#allocation2 + $0x24] sm:$0x3f]
    %v69 = vld [vmem:[#allocation2 + $0x2a] sm:$0xff]
    %v70 = vld [vmem:[#allocation2 + $0x32] sm:$0x3f]
    %v79 = vcombine.low %v63, %v65
    %v80 = vcombine.high %v63, %v65
    %v81 = vcombine.low %v67, %v69
    %v82 = vcombine.high %v67, %v69
    %v84 = vunpack.c.l.s4 1983009808
    %v85 = vunpack.c.0.s8 %v84
    %v86 = vlaneseq
    %v87 = vshrl.u32 %v86, 7
    %v88 = vsub.s32 %v85, %v87
    %v89 = vrot.slane %v79, %v88
    %v91 = vunpack.c.l.s4 1983009808
    %v92 = vunpack.c.0.s8 %v91
    %v93 = vlaneseq
    %v94 = vshrl.u32 %v93, 7
    %v95 = vsub.s32 %v92, %v94
    %v96 = vrot.slane %v80, %v95
    %v98 = vunpack.c.l.s4 1983009808
    %v99 = vunpack.c.0.s8 %v98
    %v100 = vlaneseq
    %v101 = vshrl.u32 %v100, 7
    %v102 = vsub.s32 %v99, %v101
    %v103 = vrot.slane %v81, %v102
    %v105 = vunpack.c.l.s4 1983009808
    %v106 = vunpack.c.0.s8 %v105
    %v107 = vlaneseq
    %v108 = vshrl.u32 %v107, 7
    %v109 = vsub.s32 %v106, %v108
    %v110 = vrot.slane %v82, %v109
    %v111 = vcombine.low %v89, %v103
    %v112 = vcombine.high %v89, %v103
    %v113 = vcombine.low %v96, %v110
    %v114 = vcombine.high %v96, %v110
    %v115 = vcombine.low %v64, %v66
    %v116 = vcombine.high %v64, %v66
    %v117 = vcombine.low %v68, %v70
    %v118 = vcombine.high %v68, %v70
    %v120 = vunpack.c.l.s4 1983009808
    %v121 = vunpack.c.0.s8 %v120
    %v122 = vlaneseq
    %v123 = vshrl.u32 %v122, 7
    %v124 = vsub.s32 %v121, %v123
    %v125 = vrot.slane %v115, %v124
    %v127 = vunpack.c.l.s4 1983009808
    %v128 = vunpack.c.0.s8 %v127
    %v129 = vlaneseq
    %v130 = vshrl.u32 %v129, 7
    %v131 = vsub.s32 %v128, %v130
    %v132 = vrot.slane %v116, %v131
    %v134 = vunpack.c.l.s4 1983009808
    %v135 = vunpack.c.0.s8 %v134
    %v136 = vlaneseq
    %v137 = vshrl.u32 %v136, 7
    %v138 = vsub.s32 %v135, %v137
    %v139 = vrot.slane %v117, %v138
    %v141 = vunpack.c.l.s4 1983009808
    %v142 = vunpack.c.0.s8 %v141
    %v143 = vlaneseq
    %v144 = vshrl.u32 %v143, 7
    %v145 = vsub.s32 %v142, %v144
    %v146 = vrot.slane %v118, %v145
    %v147 = vcombine.low %v125, %v139
    %v148 = vcombine.high %v125, %v139
    %v149 = vcombine.low %v132, %v146
    %v157 = vpack.c.bf16 %v111, %v111
    %v158 = vpack.c.bf16 %v112, %v112
    %v159 = vpack.c.bf16 %v113, %v113
    %v160 = vpack.c.bf16 %v114, %v114
    %v161 = vpack.c.bf16 %v147, %v147
    %v162 = vpack.c.bf16 %v148, %v148
    %v163 = vpack.c.bf16 %v149, %v149
    %v164 = vld [vmem:[#allocation5] sm:$0xf]
    %v165 = vld [vmem:[#allocation5 + $0x4] sm:$0xf]
    %v166 = vld [vmem:[#allocation5 + $0x8] sm:$0xf]
    %v167 = vld [vmem:[#allocation5 + $0xc] sm:$0xf]
    %v168 = vld [vmem:[#allocation5 + $0x10] sm:$0xf]
    %v169 = vld [vmem:[#allocation5 + $0x14] sm:$0xf]
    %v170 = vld [vmem:[#allocation5 + $0x18] sm:$0xf]
    %v171 = vld [vmem:[#allocation5 + $0x1c] sm:$0xf]
    %v172 = vld [vmem:[#allocation5 + $0x20] sm:$0xf]
    %v173 = vld [vmem:[#allocation5 + $0x24] sm:$0xf]
    %v174 = vld [vmem:[#allocation5 + $0x28] sm:$0xf]
    %v175 = vld [vmem:[#allocation5 + $0x2c] sm:$0xf]
    %v176 = vld [vmem:[#allocation5 + $0x30] sm:$0xf]
    %v177 = vld [vmem:[#allocation5 + $0x34] sm:$0xf]
    %v178 = vld [vmem:[#allocation5 + $0x38] sm:$0xf]
    %v179 = vld [vmem:[#allocation5 + $0x3c] sm:$0xf]
    %v180 = vld [vmem:[#allocation5 + $0x40] sm:$0xf]
    %v181 = vld [vmem:[#allocation5 + $0x44] sm:$0xf]
    %v182 = vld [vmem:[#allocation5 + $0x48] sm:$0xf]
    %v183 = vld [vmem:[#allocation5 + $0x4c] sm:$0xf]
    %v184 = vld [vmem:[#allocation5 + $0x50] sm:$0xf]
    %v185 = vld [vmem:[#allocation5 + $0x54] sm:$0xf]
    %v186 = vld [vmem:[#allocation5 + $0x58] sm:$0xf]
    %v187 = vld [vmem:[#allocation5 + $0x5c] sm:$0xf]
    %v188 = vld [vmem:[#allocation5 + $0x60] sm:$0xf]
    %v189 = vld [vmem:[#allocation5 + $0x64] sm:$0xf]
    %v190 = vld [vmem:[#allocation5 + $0x68] sm:$0xf]
    %v191 = vld [vmem:[#allocation5 + $0x6c] sm:$0xf]
    %v192 = vld [vmem:[#allocation5 + $0x70] sm:$0xf]
    %v193 = vld [vmem:[#allocation5 + $0x74] sm:$0xf]
    %v194 = vld [vmem:[#allocation5 + $0x78] sm:$0xf]
    %v195 = vld [vmem:[#allocation5 + $0x7c] sm:$0xf]
    %v196 = vld [vmem:[#allocation5 + $0x80] sm:$0xf]
    %v197 = vld [vmem:[#allocation5 + $0x84] sm:$0xf]
    %v198 = vld [vmem:[#allocation5 + $0x88] sm:$0xf]
    %v199 = vld [vmem:[#allocation5 + $0x8c] sm:$0xf]
    %v200 = vld [vmem:[#allocation5 + $0x90] sm:$0xf]
    %v201 = vld [vmem:[#allocation5 + $0x94] sm:$0xf]
    %v202 = vld [vmem:[#allocation5 + $0x98] sm:$0xf]
    %v203 = vld [vmem:[#allocation5 + $0x9c] sm:$0xf]
    %v204 = vld [vmem:[#allocation5 + $0xa0] sm:$0xf]
    %v205 = vld [vmem:[#allocation5 + $0xa4] sm:$0xf]
    %v206 = vld [vmem:[#allocation5 + $0xa8] sm:$0xf]
    %v207 = vld [vmem:[#allocation5 + $0xac] sm:$0xf]
    %v208 = vld [vmem:[#allocation5 + $0xb0] sm:$0xf]
    %v209 = vld [vmem:[#allocation5 + $0xb4] sm:$0xf]
    %v210 = vld [vmem:[#allocation5 + $0xb8] sm:$0xf]
    %v211 = vld [vmem:[#allocation5 + $0xbc] sm:$0xf]
    %v212 = vld [vmem:[#allocation5 + $0xc0] sm:$0xf]
    %v213 = vld [vmem:[#allocation5 + $0xc4] sm:$0xf]
    %v214 = vld [vmem:[#allocation5 + $0xc8] sm:$0xf]
    %v215 = vld [vmem:[#allocation5 + $0xcc] sm:$0xf]
    %v216 = vld [vmem:[#allocation5 + $0xd0] sm:$0xf]
    %v217 = vld [vmem:[#allocation5 + $0xd4] sm:$0xf]
    %v218 = vld [vmem:[#allocation5 + $0xd8] sm:$0xf]
    %v219 = vld [vmem:[#allocation5 + $0xdc] sm:$0xf]
    %v220 = vld [vmem:[#allocation5 + $0xe0] sm:$0xf]
    %v221 = vld [vmem:[#allocation5 + $0xe4] sm:$0xf]
    %v222 = vld [vmem:[#allocation5 + $0xe8] sm:$0xf]
    %v223 = vld [vmem:[#allocation5 + $0xec] sm:$0xf]
    %v224 = vld [vmem:[#allocation5 + $0xf0] sm:$0xf]
    %v225 = vld [vmem:[#allocation5 + $0xf4] sm:$0xf]
    %v226 = vld [vmem:[#allocation5 + $0xf8] sm:$0xf]
    %v227 = vld [vmem:[#allocation5 + $0xfc] sm:$0xf]
    %v228 = vld [vmem:[#allocation5 + $0x100] sm:$0xf]
    %v229 = vld [vmem:[#allocation5 + $0x104] sm:$0xf]
    %v230 = vld [vmem:[#allocation5 + $0x108] sm:$0xf]
    %v231 = vld [vmem:[#allocation5 + $0x10c] sm:$0xf]
    %v232 = vld [vmem:[#allocation5 + $0x110] sm:$0xf]
    %v233 = vld [vmem:[#allocation5 + $0x114] sm:$0xf]
    %v234 = vld [vmem:[#allocation5 + $0x118] sm:$0xf]
    %v235 = vld [vmem:[#allocation5 + $0x11c] sm:$0xf]
    %v236 = vld [vmem:[#allocation5 + $0x120] sm:$0xf]
    %v237 = vld [vmem:[#allocation5 + $0x124] sm:$0xf]
    %v238 = vld [vmem:[#allocation5 + $0x128] sm:$0xf]
    %v239 = vld [vmem:[#allocation5 + $0x12c] sm:$0xf]
    %v240 = vld [vmem:[#allocation5 + $0x130] sm:$0xf]
    %v241 = vld [vmem:[#allocation5 + $0x134] sm:$0xf]
    %v242 = vld [vmem:[#allocation5 + $0x138] sm:$0xf]
    %v243 = vld [vmem:[#allocation5 + $0x13c] sm:$0xf]
    %v244 = vld [vmem:[#allocation5 + $0x140] sm:$0xf]
    %v245 = vld [vmem:[#allocation5 + $0x144] sm:$0xf]
    %v246 = vld [vmem:[#allocation5 + $0x148] sm:$0xf]
    %v247 = vld [vmem:[#allocation5 + $0x14c] sm:$0xf]
    %v248 = vld [vmem:[#allocation5 + $0x150] sm:$0xf]
    %v249 = vld [vmem:[#allocation5 + $0x154] sm:$0xf]
    %v250 = vld [vmem:[#allocation5 + $0x158] sm:$0xf]
    %v251 = vld [vmem:[#allocation5 + $0x15c] sm:$0xf]
    %v252 = vld [vmem:[#allocation5 + $0x160] sm:$0xf]
    %v253 = vld [vmem:[#allocation5 + $0x164] sm:$0xf]
    %v254 = vld [vmem:[#allocation5 + $0x168] sm:$0xf]
    %v255 = vld [vmem:[#allocation5 + $0x16c] sm:$0xf]
    %v256 = vld [vmem:[#allocation5 + $0x170] sm:$0xf]
    %v257 = vld [vmem:[#allocation5 + $0x174] sm:$0xf]
    %v258 = vld [vmem:[#allocation5 + $0x178] sm:$0xf]
    %v259 = vld [vmem:[#allocation5 + $0x17c] sm:$0xf]
    %v260 = vld [vmem:[#allocation5 + $0x180] sm:$0xf]
    %v261 = vld [vmem:[#allocation5 + $0x184] sm:$0xf]
    %v262 = vld [vmem:[%s2] sm:$0x1]
    %v264 = vlaneseq
    %v265 = vshrl.u32 %v264, 7
    %v266 = vsub.s32 0, %v265
    %v267 = vrot.slane %v262, %v266
    %v367 = vunpack.c.l.b16 %v164
    %v368 = vunpack.c.l.b16 %v165
    %v369 = vunpack.c.l.b16 %v166
    %v370 = vunpack.c.l.b16 %v167
    %v371 = vunpack.c.l.b16 %v168
    %v372 = vunpack.c.l.b16 %v169
    %v373 = vunpack.c.l.b16 %v170
    %v374 = vunpack.c.l.b16 %v171
    %v375 = vunpack.c.l.b16 %v172
    %v376 = vunpack.c.l.b16 %v173
    %v377 = vunpack.c.l.b16 %v174
    %v378 = vunpack.c.l.b16 %v175
    %v379 = vunpack.c.l.b16 %v176
    %v380 = vunpack.c.l.b16 %v177
    %v381 = vunpack.c.l.b16 %v178
    %v382 = vunpack.c.l.b16 %v179
    %v383 = vunpack.c.l.b16 %v180
    %v384 = vunpack.c.l.b16 %v181
    %v385 = vunpack.c.l.b16 %v182
    %v386 = vunpack.c.l.b16 %v183
    %v387 = vunpack.c.l.b16 %v184
    %v388 = vunpack.c.l.b16 %v185
    %v389 = vunpack.c.l.b16 %v186
    %v390 = vunpack.c.l.b16 %v187
    %v391 = vunpack.c.l.b16 %v188
    %v392 = vunpack.c.l.b16 %v189
    %v393 = vunpack.c.l.b16 %v190
    %v394 = vunpack.c.l.b16 %v191
    %v395 = vunpack.c.l.b16 %v192
    %v396 = vunpack.c.l.b16 %v193
    %v397 = vunpack.c.l.b16 %v194
    %v398 = vunpack.c.l.b16 %v195
    %v399 = vunpack.c.l.b16 %v196
    %v400 = vunpack.c.l.b16 %v197
    %v401 = vunpack.c.l.b16 %v198
    %v402 = vunpack.c.l.b16 %v199
    %v403 = vunpack.c.l.b16 %v200
    %v404 = vunpack.c.l.b16 %v201
    %v405 = vunpack.c.l.b16 %v202
    %v406 = vunpack.c.l.b16 %v203
    %v407 = vunpack.c.l.b16 %v204
    %v408 = vunpack.c.l.b16 %v205
    %v409 = vunpack.c.l.b16 %v206
    %v410 = vunpack.c.l.b16 %v207
    %v411 = vunpack.c.l.b16 %v208
    %v412 = vunpack.c.l.b16 %v209
    %v413 = vunpack.c.l.b16 %v210
    %v414 = vunpack.c.l.b16 %v211
    %v415 = vunpack.c.l.b16 %v212
    %v416 = vunpack.c.l.b16 %v213
    %v417 = vunpack.c.l.b16 %v214
    %v418 = vunpack.c.l.b16 %v215
    %v419 = vunpack.c.l.b16 %v216
    %v420 = vunpack.c.l.b16 %v217
    %v421 = vunpack.c.l.b16 %v218
    %v422 = vunpack.c.l.b16 %v219
    %v423 = vunpack.c.l.b16 %v220
    %v424 = vunpack.c.l.b16 %v221
    %v425 = vunpack.c.l.b16 %v222
    %v426 = vunpack.c.l.b16 %v223
    %v427 = vunpack.c.l.b16 %v224
    %v428 = vunpack.c.l.b16 %v225
    %v429 = vunpack.c.l.b16 %v226
    %v430 = vunpack.c.l.b16 %v227
    %v431 = vunpack.c.l.b16 %v228
    %v432 = vunpack.c.l.b16 %v229
    %v433 = vunpack.c.l.b16 %v230
    %v434 = vunpack.c.l.b16 %v231
    %v435 = vunpack.c.l.b16 %v232
    %v436 = vunpack.c.l.b16 %v233
    %v437 = vunpack.c.l.b16 %v234
    %v438 = vunpack.c.l.b16 %v235
    %v439 = vunpack.c.l.b16 %v236
    %v440 = vunpack.c.l.b16 %v237
    %v441 = vunpack.c.l.b16 %v238
    %v442 = vunpack.c.l.b16 %v239
    %v443 = vunpack.c.l.b16 %v240
    %v444 = vunpack.c.l.b16 %v241
    %v445 = vunpack.c.l.b16 %v242
    %v446 = vunpack.c.l.b16 %v243
    %v447 = vunpack.c.l.b16 %v244
    %v448 = vunpack.c.l.b16 %v245
    %v449 = vunpack.c.l.b16 %v246
    %v450 = vunpack.c.l.b16 %v247
    %v451 = vunpack.c.l.b16 %v248
    %v452 = vunpack.c.l.b16 %v249
    %v453 = vunpack.c.l.b16 %v250
    %v454 = vunpack.c.l.b16 %v251
    %v455 = vunpack.c.l.b16 %v252
    %v456 = vunpack.c.l.b16 %v253
    %v457 = vunpack.c.l.b16 %v254
    %v458 = vunpack.c.l.b16 %v255
    %v459 = vunpack.c.l.b16 %v256
    %v460 = vunpack.c.l.b16 %v257
    %v461 = vunpack.c.l.b16 %v258
    %v462 = vunpack.c.l.b16 %v259
    %v463 = vunpack.c.l.b16 %v260
    %v464 = vunpack.c.l.b16 %v261
    %v465 = vpack.c.b16 %v368, %v367
    %v466 = vpack.c.b16 %v370, %v369
    %v467 = vpack.c.b16 %v372, %v371
    %v468 = vpack.c.b16 %v374, %v373
    %v469 = vpack.c.b16 %v376, %v375
    %v470 = vpack.c.b16 %v378, %v377
    %v471 = vpack.c.b16 %v380, %v379
    %v472 = vpack.c.b16 %v382, %v381
    %v473 = vpack.c.b16 %v384, %v383
    %v474 = vpack.c.b16 %v386, %v385
    %v475 = vpack.c.b16 %v388, %v387
    %v476 = vpack.c.b16 %v390, %v389
    %v477 = vpack.c.b16 %v392, %v391
    %v478 = vpack.c.b16 %v394, %v393
    %v479 = vpack.c.b16 %v396, %v395
    %v480 = vpack.c.b16 %v398, %v397
    %v481 = vpack.c.b16 %v400, %v399
    %v482 = vpack.c.b16 %v402, %v401
    %v483 = vpack.c.b16 %v404, %v403
    %v484 = vpack.c.b16 %v406, %v405
    %v485 = vpack.c.b16 %v408, %v407
    %v486 = vpack.c.b16 %v410, %v409
    %v487 = vpack.c.b16 %v412, %v411
    %v488 = vpack.c.b16 %v414, %v413
    %v489 = vpack.c.b16 %v416, %v415
    %v490 = vpack.c.b16 %v418, %v417
    %v491 = vpack.c.b16 %v420, %v419
    %v492 = vpack.c.b16 %v422, %v421
    %v493 = vpack.c.b16 %v424, %v423
    %v494 = vpack.c.b16 %v426, %v425
    %v495 = vpack.c.b16 %v428, %v427
    %v496 = vpack.c.b16 %v430, %v429
    %v497 = vpack.c.b16 %v432, %v431
    %v498 = vpack.c.b16 %v434, %v433
    %v499 = vpack.c.b16 %v436, %v435
    %v500 = vpack.c.b16 %v438, %v437
    %v501 = vpack.c.b16 %v440, %v439
    %v502 = vpack.c.b16 %v442, %v441
    %v503 = vpack.c.b16 %v444, %v443
    %v504 = vpack.c.b16 %v446, %v445
    %v505 = vpack.c.b16 %v448, %v447
    %v506 = vpack.c.b16 %v450, %v449
    %v507 = vpack.c.b16 %v452, %v451
    %v508 = vpack.c.b16 %v454, %v453
    %v509 = vpack.c.b16 %v456, %v455
    %v510 = vpack.c.b16 %v458, %v457
    %v511 = vpack.c.b16 %v460, %v459
    %v512 = vpack.c.b16 %v462, %v461
    %v513 = vpack.c.b16 %v464, %v463
    %vm563 = vcmask 130048
    %v565 = vsel %vm563, %v163, 0
    %567 = vmatprep.subr.bf16.mxu0 0
    %568 = vmatpush1.bf16.msra.mxu0 %v465
    %569 = vmatprep.subr.bf16.mxu0 0
    %570 = vmatpush1.bf16.msra.mxu0 %v466
    %571 = vmatprep.subr.bf16.mxu0 0
    %572 = vmatpush1.bf16.msra.mxu0 %v467
    %573 = vmatprep.subr.bf16.mxu0 0
    %574 = vmatpush1.bf16.msra.mxu0 %v468
    %575 = vmatprep.subr.bf16.mxu0 0
    %576 = vmatpush1.bf16.msra.mxu0 %v469
    %577 = vmatprep.subr.bf16.mxu0 0
    %578 = vmatpush1.bf16.msra.mxu0 %v470
    %579 = vmatprep.subr.bf16.mxu0 0
    %580 = vmatpush1.bf16.msra.mxu0 %v471
    %581 = vmatprep.subr.bf16.mxu0 0
    %582 = vmatpush1.bf16.msra.mxu0 %v472
    %583 = vmatprep.subr.bf16.mxu0 0
    %584 = vmatpush1.bf16.msra.mxu0 %v473
    %585 = vmatprep.subr.bf16.mxu0 0
    %586 = vmatpush1.bf16.msra.mxu0 %v474
    %587 = vmatprep.subr.bf16.mxu0 0
    %588 = vmatpush1.bf16.msra.mxu0 %v475
    %589 = vmatprep.subr.bf16.mxu0 0
    %590 = vmatpush1.bf16.msra.mxu0 %v476
    %591 = vmatprep.subr.bf16.mxu0 0
    %592 = vmatpush1.bf16.msra.mxu0 %v477
    %593 = vmatprep.subr.bf16.mxu0 0
    %594 = vmatpush1.bf16.msra.mxu0 %v478
    %595 = vmatprep.subr.bf16.mxu0 0
    %596 = vmatpush1.bf16.msra.mxu0 %v479
    %597 = vmatprep.subr.bf16.mxu0 0
    %598 = vmatpush1.bf16.msra.mxu0 %v480
    %599 = vmatprep.mubr.bf16.mxu0 %v158
    %600 = vmatmul.mubr.bf16.gmra.mrb[0].mxu0 %v157
    %v601 = vpop.f32.mrb[0].mxu0
    %v602 = vadd.f32 %v267, %v601
    %v603 = vpop.f32.mrb[0].mxu0
    %v604 = vpop.f32.mrb[0].mxu0
    %v605 = vpop.f32.mrb[0].mxu0
    %606 = vdwg.mxu0
    %607 = vmatprep.subr.bf16.mxu0 0
    %608 = vmatpush1.bf16.msra.mxu0 %v481
    %609 = vmatprep.subr.bf16.mxu0 0
    %610 = vmatpush1.bf16.msra.mxu0 %v482
    %611 = vmatprep.subr.bf16.mxu0 0
    %612 = vmatpush1.bf16.msra.mxu0 %v483
    %613 = vmatprep.subr.bf16.mxu0 0
    %614 = vmatpush1.bf16.msra.mxu0 %v484
    %615 = vmatprep.subr.bf16.mxu0 0
    %616 = vmatpush1.bf16.msra.mxu0 %v485
    %617 = vmatprep.subr.bf16.mxu0 0
    %618 = vmatpush1.bf16.msra.mxu0 %v486
    %619 = vmatprep.subr.bf16.mxu0 0
    %620 = vmatpush1.bf16.msra.mxu0 %v487
    %621 = vmatprep.subr.bf16.mxu0 0
    %622 = vmatpush1.bf16.msra.mxu0 %v488
    %623 = vmatprep.subr.bf16.mxu0 0
    %624 = vmatpush1.bf16.msra.mxu0 %v489
    %625 = vmatprep.subr.bf16.mxu0 0
    %626 = vmatpush1.bf16.msra.mxu0 %v490
    %627 = vmatprep.subr.bf16.mxu0 0
    %628 = vmatpush1.bf16.msra.mxu0 %v491
    %629 = vmatprep.subr.bf16.mxu0 0
    %630 = vmatpush1.bf16.msra.mxu0 %v492
    %631 = vmatprep.subr.bf16.mxu0 0
    %632 = vmatpush1.bf16.msra.mxu0 %v493
    %633 = vmatprep.subr.bf16.mxu0 0
    %634 = vmatpush1.bf16.msra.mxu0 %v494
    %635 = vmatprep.subr.bf16.mxu0 0
    %636 = vmatpush1.bf16.msra.mxu0 %v495
    %637 = vmatprep.subr.bf16.mxu0 0
    %638 = vmatpush1.bf16.msra.mxu0 %v496
    %639 = vmatprep.mubr.bf16.mxu0 %v160
    %640 = vmatmul.mubr.bf16.gmra.mrb[0].mxu0 %v159
    %v641 = vpop.f32.mrb[0].mxu0
    %v642 = vadd.f32 %v602, %v641
    %v643 = vpop.f32.mrb[0].mxu0
    %v644 = vpop.f32.mrb[0].mxu0
    %v645 = vpop.f32.mrb[0].mxu0
    %646 = vdwg.mxu0
    %647 = vmatprep.subr.bf16.mxu0 0
    %648 = vmatpush1.bf16.msra.mxu0 %v497
    %649 = vmatprep.subr.bf16.mxu0 0
    %650 = vmatpush1.bf16.msra.mxu0 %v498
    %651 = vmatprep.subr.bf16.mxu0 0
    %652 = vmatpush1.bf16.msra.mxu0 %v499
    %653 = vmatprep.subr.bf16.mxu0 0
    %654 = vmatpush1.bf16.msra.mxu0 %v500
    %655 = vmatprep.subr.bf16.mxu0 0
    %656 = vmatpush1.bf16.msra.mxu0 %v501
    %657 = vmatprep.subr.bf16.mxu0 0
    %658 = vmatpush1.bf16.msra.mxu0 %v502
    %659 = vmatprep.subr.bf16.mxu0 0
    %660 = vmatpush1.bf16.msra.mxu0 %v503
    %661 = vmatprep.subr.bf16.mxu0 0
    %662 = vmatpush1.bf16.msra.mxu0 %v504
    %663 = vmatprep.subr.bf16.mxu0 0
    %664 = vmatpush1.bf16.msra.mxu0 %v505
    %665 = vmatprep.subr.bf16.mxu0 0
    %666 = vmatpush1.bf16.msra.mxu0 %v506
    %667 = vmatprep.subr.bf16.mxu0 0
    %668 = vmatpush1.bf16.msra.mxu0 %v507
    %669 = vmatprep.subr.bf16.mxu0 0
    %670 = vmatpush1.bf16.msra.mxu0 %v508
    %671 = vmatprep.subr.bf16.mxu0 0
    %672 = vmatpush1.bf16.msra.mxu0 %v509
    %673 = vmatprep.subr.bf16.mxu0 0
    %674 = vmatpush1.bf16.msra.mxu0 %v510
    %675 = vmatprep.subr.bf16.mxu0 0
    %676 = vmatpush1.bf16.msra.mxu0 %v511
    %677 = vmatprep.subr.bf16.mxu0 0
    %678 = vmatpush1.bf16.msra.mxu0 %v512
    %679 = vmatprep.mubr.bf16.mxu0 %v162
    %680 = vmatmul.mubr.bf16.gmra.mrb[0].mxu0 %v161
    %v681 = vpop.f32.mrb[0].mxu0
    %v682 = vadd.f32 %v642, %v681
    %v683 = vpop.f32.mrb[0].mxu0
    %v684 = vpop.f32.mrb[0].mxu0
    %v685 = vpop.f32.mrb[0].mxu0
    %686 = vdwg.mxu0
    %687 = vmatprep.subr.bf16.mxu0 0
    %688 = vmatpush1.bf16.msra.mxu0 %v513
    %689 = vmatprep.subr.bf16.mxu0 0
    %690 = vmatpush1.bf16.msra.mxu0 0
    %691 = vmatprep.subr.bf16.mxu0 0
    %692 = vmatpush1.bf16.msra.mxu0 0
    %693 = vmatprep.subr.bf16.mxu0 0
    %694 = vmatpush1.bf16.msra.mxu0 0
    %695 = vmatprep.subr.bf16.mxu0 0
    %696 = vmatpush1.bf16.msra.mxu0 0
    %697 = vmatprep.subr.bf16.mxu0 0
    %698 = vmatpush1.bf16.msra.mxu0 0
    %699 = vmatprep.subr.bf16.mxu0 0
    %700 = vmatpush1.bf16.msra.mxu0 0
    %701 = vmatprep.subr.bf16.mxu0 0
    %702 = vmatpush1.bf16.msra.mxu0 0
    %703 = vmatprep.subr.bf16.mxu0 0
    %704 = vmatpush1.bf16.msra.mxu0 0
    %705 = vmatprep.subr.bf16.mxu0 0
    %706 = vmatpush1.bf16.msra.mxu0 0
    %707 = vmatprep.subr.bf16.mxu0 0
    %708 = vmatpush1.bf16.msra.mxu0 0
    %709 = vmatprep.subr.bf16.mxu0 0
    %710 = vmatpush1.bf16.msra.mxu0 0
    %711 = vmatprep.subr.bf16.mxu0 0
    %712 = vmatpush1.bf16.msra.mxu0 0
    %713 = vmatprep.subr.bf16.mxu0 0
    %714 = vmatpush1.bf16.msra.mxu0 0
    %715 = vmatprep.subr.bf16.mxu0 0
    %716 = vmatpush1.bf16.msra.mxu0 0
    %717 = vmatprep.subr.bf16.mxu0 0
    %718 = vmatpush1.bf16.msra.mxu0 0
    %719 = vmatprep.mubr.bf16.mxu0 0
    %720 = vmatmul.mubr.bf16.gmra.mrb[0].mxu0 %v565
    %v721 = vpop.f32.mrb[0].mxu0
    %v722 = vadd.f32 %v682, %v721
    %v723 = vpop.f32.mrb[0].mxu0
    %v724 = vpop.f32.mrb[0].mxu0
    %v725 = vpop.f32.mrb[0].mxu0
    %726 = vdwg.mxu0
    %v727 = vmax.f32 %v722, 0.0
    %v728 = vpack.c.bf16 %v727, %v727
    %v729 = vld [vmem:[#allocation7] sm:$0xf]
    %v730 = vld [vmem:[#allocation7 + $0x4] sm:$0xf]
    %v731 = vld [vmem:[#allocation7 + $0x8] sm:$0xf]
    %v732 = vld [vmem:[#allocation7 + $0xc] sm:$0xf]
    %v733 = vld [vmem:[#allocation7 + $0x10] sm:$0xf]
    %v734 = vld [vmem:[#allocation7 + $0x14] sm:$0xf]
    %v735 = vld [vmem:[#allocation7 + $0x18] sm:$0xf]
    %v736 = vld [vmem:[#allocation7 + $0x1c] sm:$0xf]
    %v737 = vld [vmem:[#allocation7 + $0x20] sm:$0xf]
    %v738 = vld [vmem:[#allocation7 + $0x24] sm:$0xf]
    %v739 = vld [vmem:[#allocation7 + $0x28] sm:$0xf]
    %v740 = vld [vmem:[#allocation7 + $0x2c] sm:$0xf]
    %v741 = vld [vmem:[#allocation7 + $0x30] sm:$0xf]
    %v742 = vld [vmem:[#allocation7 + $0x34] sm:$0xf]
    %v743 = vld [vmem:[#allocation7 + $0x38] sm:$0xf]
    %v744 = vld [vmem:[#allocation7 + $0x3c] sm:$0xf]
    %v745 = vld [vmem:[%s4] sm:$0x1]
    %v747 = vlaneseq
    %v748 = vshrl.u32 %v747, 7
    %v749 = vsub.s32 0, %v748
    %v750 = vrot.slane %v745, %v749
    %v768 = vunpack.c.l.b16 %v729
    %v769 = vunpack.c.l.b16 %v730
    %v770 = vunpack.c.l.b16 %v731
    %v771 = vunpack.c.l.b16 %v732
    %v772 = vunpack.c.l.b16 %v733
    %v773 = vunpack.c.l.b16 %v734
    %v774 = vunpack.c.l.b16 %v735
    %v775 = vunpack.c.l.b16 %v736
    %v776 = vunpack.c.l.b16 %v737
    %v777 = vunpack.c.l.b16 %v738
    %v778 = vunpack.c.l.b16 %v739
    %v779 = vunpack.c.l.b16 %v740
    %v780 = vunpack.c.l.b16 %v741
    %v781 = vunpack.c.l.b16 %v742
    %v782 = vunpack.c.l.b16 %v743
    %v783 = vunpack.c.l.b16 %v744
    %v784 = vpack.c.b16 %v769, %v768
    %v785 = vpack.c.b16 %v771, %v770
    %v786 = vpack.c.b16 %v773, %v772
    %v787 = vpack.c.b16 %v775, %v774
    %v788 = vpack.c.b16 %v777, %v776
    %v789 = vpack.c.b16 %v779, %v778
    %v790 = vpack.c.b16 %v781, %v780
    %v791 = vpack.c.b16 %v783, %v782
    %800 = vmatprep.subr.bf16.mxu0 0
    %801 = vmatpush1.bf16.msra.mxu0 %v784
    %802 = vmatprep.subr.bf16.mxu0 0
    %803 = vmatpush1.bf16.msra.mxu0 %v785
    %804 = vmatprep.subr.bf16.mxu0 0
    %805 = vmatpush1.bf16.msra.mxu0 %v786
    %806 = vmatprep.subr.bf16.mxu0 0
    %807 = vmatpush1.bf16.msra.mxu0 %v787
    %808 = vmatprep.subr.bf16.mxu0 0
    %809 = vmatpush1.bf16.msra.mxu0 %v788
    %810 = vmatprep.subr.bf16.mxu0 0
    %811 = vmatpush1.bf16.msra.mxu0 %v789
    %812 = vmatprep.subr.bf16.mxu0 0
    %813 = vmatpush1.bf16.msra.mxu0 %v790
    %814 = vmatprep.subr.bf16.mxu0 0
    %815 = vmatpush1.bf16.msra.mxu0 %v791
    %816 = vmatprep.subr.bf16.mxu0 0
    %817 = vmatpush1.bf16.msra.mxu0 0
    %818 = vmatprep.subr.bf16.mxu0 0
    %819 = vmatpush1.bf16.msra.mxu0 0
    %820 = vmatprep.subr.bf16.mxu0 0
    %821 = vmatpush1.bf16.msra.mxu0 0
    %822 = vmatprep.subr.bf16.mxu0 0
    %823 = vmatpush1.bf16.msra.mxu0 0
    %824 = vmatprep.subr.bf16.mxu0 0
    %825 = vmatpush1.bf16.msra.mxu0 0
    %826 = vmatprep.subr.bf16.mxu0 0
    %827 = vmatpush1.bf16.msra.mxu0 0
    %828 = vmatprep.subr.bf16.mxu0 0
    %829 = vmatpush1.bf16.msra.mxu0 0
    %830 = vmatprep.subr.bf16.mxu0 0
    %831 = vmatpush1.bf16.msra.mxu0 0
    %832 = vmatprep.mubr.bf16.mxu0 0
    %833 = vmatmul.mubr.bf16.gmra.mrb[0].mxu0 %v728
    %v834 = vpop.f32.mrb[0].mxu0
    %v835 = vadd.f32 %v750, %v834
    %v836 = vpop.f32.mrb[0].mxu0
    %v837 = vpop.f32.mrb[0].mxu0
    %v838 = vpop.f32.mrb[0].mxu0
    %839 = vdwg.mxu0
    %v840 = vpack.c.bf16 %v835, %v835
    %v843 = vunpack.c.l.s4 1966171168
    %v844 = vunpack.c.0.s8 %v843
    %v845 = vlaneseq
    %v846 = vshrl.u32 %v845, 7
    %v847 = vsub.s32 %v844, %v846
    %v848 = vrot.slane %v840, %v847
    %v849 = vcombine.high %v848, %v848
    %v851 = vunpack.c.l.s4 1966171168
    %v852 = vunpack.c.0.s8 %v851
    %v853 = vlaneseq
    %v854 = vshrl.u32 %v853, 7
    %v855 = vsub.s32 %v852, %v854
    %v856 = vrot.slane %v848, %v855
    %v858 = vunpack.c.l.s4 1966171168
    %v859 = vunpack.c.0.s8 %v858
    %v860 = vlaneseq
    %v861 = vshrl.u32 %v860, 7
    %v862 = vsub.s32 %v859, %v861
    %v863 = vrot.slane %v849, %v862
    %v864 = vcombine.high %v856, %v856
    %v865 = vcombine.high %v863, %v863
    %870 = vst [vmem:[#allocation8] sm:$0x1] %v856
    %871 = vst [vmem:[#allocation8 + $0x1] sm:$0x1] %v863
    %872 = vst [vmem:[#allocation8 + $0x2] sm:$0x1] %v864
    %873 = vst [vmem:[#allocation8 + $0x3] sm:$0x1] %v865
    // Predicated region
    $region34: #{tpu_custom_call.1} parent=1 // pred_check
      _
    $region35: #{tpu_custom_call.1} parent=1 // pred_check_branch
      %875 = sbr.rel (0) target = $region37
    $region36: #{tpu_custom_call.1} parent=1 // pred_region
      %s877 = ssub.s32 64, 16
      %878 = vsyncadd [#allocation4], %s877
      %s879 = sshll.u32 [#allocation8], 4
      %s880 = int_to_ptr.vmem [resolvable:$true] %s879
      %885 = dma.vmem_to_hbm [thread:$0]  %s880, 16, %s5, [#allocation4], 16, 16, 1
    $region37: #{tpu_custom_call.1} parent=1 // pred_fallthru
      _
    // Predicated region
    $region38: #{tpu_custom_call.1} parent=1 // pred_check
      _
    $region39: #{tpu_custom_call.1} parent=1 // pred_check_branch
      %887 = sbr.rel (0) target = $region41
    $region40: #{tpu_custom_call.1} parent=1 // pred_region
      %888 = dma.done [#allocation4], 64
    $region41: #{tpu_custom_call.1} parent=1 // pred_fallthru
      _
    %889 = vsyncpa [#allocation3], 1
    %890 = vsyncpa [#allocation6], 1
    %891 = vsyncpa [#allocation4], 1

</llo_original>
